<compile_context>
chip_gen: v7x
topology: tpu7x:2x2x1
jax: 0.10.0
libtpu: 0.0.40
codegen_flags: <defaults>
</compile_context>

<pallas_src>
import jax
import jax.numpy as jnp
from jax.experimental import pallas as pl
from jax.experimental.pallas import tpu as pltpu


def _linear_gated_kernel(x_ref, pot_ref, params_ref, act_ref, pot_ng_ref):
    potential = pot_ref[...] + x_ref[...]
    tresh = params_ref[0:1, :]          # (1, W) -> broadcasts over batch rows
    decay = params_ref[1:2, :]          # (1, W)

    # relu(potential - tresh) > 0  <=>  potential > tresh
    # (boundary potential == tresh is non-spiking, matching the torch module)
    spike = potential > tresh
    zeros = jnp.zeros_like(potential)

    act_ref[...] = jnp.where(spike, potential, zeros)
    pot_ng_ref[...] = jnp.where(spike, zeros, potential * decay)


def _round_up(n, m):
    return ((n + m - 1) // m) * m


def _choose_batch_tile(B, W, itemsize, vmem_budget_bytes, target_step_bytes):
    """Pick the batch tile TB (multiple of 8, or B itself when B <= 8)."""
    if B <= 8:
        # block second-to-last dim equal to the full array dim is always legal
        return B

    row_bytes = 4 * W * itemsize                       # 4 streamed arrays per row
    b_ceil = _round_up(B, 8)

    # Large enough per step to amortize the ~0.35us fixed grid-step overhead.
    tb = max(target_step_bytes // row_bytes, 8)
    # Bounded by the double-buffered VMEM budget for the 4 streams.
    tb = min(tb, max(vmem_budget_bytes // (2 * row_bytes), 8))
    # Never inflate beyond the actual batch.
    tb = min(tb, b_ceil)
    # Keep >= 2 grid steps when the batch allows, so ("parallel",) can shard
    # the grid across v7x's two TensorCores (harmless on v5e/v6e).
    if b_ceil >= 16:
        tb = min(tb, _round_up(pl.cdiv(b_ceil, 2), 8))

    return max(8, (tb // 8) * 8)


def linear_gated_forward(x, potential, tresh, decay_rate, *,
                         vmem_budget_bytes=12 * 1024 * 1024,
                         target_step_bytes=6 * 1024 * 1024):
    """x, potential: (B, W); tresh, decay_rate: (W,).

    Returns (activated, potential_non_gated), both (B, W).
    """
    B, W = x.shape
    itemsize = jnp.dtype(x.dtype).itemsize

    TB = _choose_batch_tile(B, W, itemsize, vmem_budget_bytes, target_step_bytes)
    grid = (pl.cdiv(B, TB),)

    # Single tiny parameter stream: row 0 = tresh, row 1 = decay_rate.
    params = jnp.stack([tresh, decay_rate], axis=0)    # (2, W)

    tile_spec = pl.BlockSpec((TB, W), lambda i: (i, 0))
    param_spec = pl.BlockSpec((2, W), lambda i: (0, 0))

    # Explicit scoped-VMEM sizing: 4 streams x 2 buffers x tile + params,
    # plus headroom, floored at 8 MiB (safe on every generation).
    stream_bytes = 4 * 2 * TB * W * itemsize
    param_bytes = 2 * 2 * W * itemsize
    vmem_limit = max(8 * 1024 * 1024,
                     int(1.5 * (stream_bytes + param_bytes)) + (1 << 20))

    cost = pl.CostEstimate(
        flops=5 * B * W,
        transcendentals=0,
        bytes_accessed=4 * B * W * itemsize + 2 * W * itemsize,
    )

    out_shapes = (
        jax.ShapeDtypeStruct((B, W), x.dtype),
        jax.ShapeDtypeStruct((B, W), x.dtype),
    )

    return pl.pallas_call(
        _linear_gated_kernel,
        out_shape=out_shapes,
        grid=grid,
        in_specs=[
            tile_spec,    # x
            tile_spec,    # potential
            param_spec,   # [tresh; decay_rate]
        ],
        out_specs=(tile_spec, tile_spec),
        compiler_params=pltpu.CompilerParams(
            dimension_semantics=("parallel",),
            vmem_limit_bytes=vmem_limit,
        ),
        cost_estimate=cost,
    )(x, potential, params)


def _reference(x, potential, tresh, decay_rate):
    potential = potential + x
    gated = jnp.maximum(potential - tresh[None, :], 0.0)
    gated_bool = (gated > 0.0).astype(x.dtype)
    non_gated_bool = (gated == 0.0).astype(x.dtype)
    activated = gated_bool * potential
    potential_non_gated = potential * non_gated_bool * decay_rate[None, :]
    return activated, potential_non_gated


def _run_case(key, batch, width):
    k1, k2, k3, k4 = jax.random.split(key, 4)
    # Deterministic "parameter init" mirroring the module's __init__:
    #   tresh      = |U(0,1)| * 0.3 + 0.0
    #   decay_rate = |U(0,1)| * 0.7 + 0.1
    tresh = jnp.abs(jax.random.uniform(k1, (width,), jnp.float32)) * 0.3 + 0.0
    decay_rate = jnp.abs(jax.random.uniform(k2, (width,), jnp.float32)) * 0.7 + 0.1
    x = jax.random.normal(k3, (batch, width), jnp.float32)
    potential = jax.random.normal(k4, (batch, width), jnp.float32)

    activated, pot_ng = linear_gated_forward(x, potential, tresh, decay_rate)
    jax.block_until_ready((activated, pot_ng))

    ref_act, ref_png = _reference(x, potential, tresh, decay_rate)
    assert activated.shape == (batch, width) and pot_ng.shape == (batch, width)
    assert jnp.allclose(activated, ref_act, atol=1e-6), "activated mismatch"
    assert jnp.allclose(pot_ng, ref_png, atol=1e-6), "potential_non_gated mismatch"


if __name__ == "__main__":
    key = jax.random.PRNGKey(0)
    k_a, k_b = jax.random.split(key)

    # Aligned small shape (single full block).
    _run_case(k_a, batch=8, width=128)
    # Ragged shape: exercises the no-pad path (partial last batch block and a
    # feature width below one lane tile -> masked tail stores, no wrapper pad).
    _run_case(k_b, batch=10, width=96)

    print("KERNEL_OK")
</pallas_src>

<mosaic_0001>
module attributes {stable_mosaic.version = 11 : i64} {
  func.func @_linear_gated_kernel(%arg0: i32, %arg1: memref<8x128xf32, #tpu.memory_space<vmem>>, %arg2: memref<8x128xf32, #tpu.memory_space<vmem>>, %arg3: memref<2x128xf32, #tpu.memory_space<vmem>>, %arg4: memref<8x128xf32, #tpu.memory_space<vmem>>, %arg5: memref<8x128xf32, #tpu.memory_space<vmem>>) attributes {dimension_semantics = [#tpu.dimension_semantics<parallel>], iteration_bounds = array<i64: 1>, scalar_prefetch = 0 : i64, scratch_operands = 0 : i64, tpu.core_type = #tpu.core_type<tc>, window_params = [{transform_indices = @transform_0, window_bounds = array<i64: 8, 128>}, {transform_indices = @transform_1, window_bounds = array<i64: 8, 128>}, {pipeline_mode = #tpu.pipeline_mode<synchronous>, transform_indices = @transform_2, window_bounds = array<i64: 2, 128>}, {transform_indices = @transform_3, window_bounds = array<i64: 8, 128>}, {transform_indices = @transform_4, window_bounds = array<i64: 8, 128>}]} {
    %c0 = arith.constant 0 : index
    %c0_0 = arith.constant 0 : index
    %0 = vector.load %arg2[%c0, %c0_0] : memref<8x128xf32, #tpu.memory_space<vmem>>, vector<8x128xf32>
    %c0_1 = arith.constant 0 : index
    %c0_2 = arith.constant 0 : index
    %1 = vector.load %arg1[%c0_1, %c0_2] : memref<8x128xf32, #tpu.memory_space<vmem>>, vector<8x128xf32>
    %2 = arith.addf %0, %1 : vector<8x128xf32>
    %c0_3 = arith.constant 0 : index
    %c0_4 = arith.constant 0 : index
    %3 = vector.load %arg3[%c0_3, %c0_4] : memref<2x128xf32, #tpu.memory_space<vmem>>, vector<1x128xf32>
    %c1 = arith.constant 1 : index
    %c0_5 = arith.constant 0 : index
    %4 = vector.load %arg3[%c1, %c0_5] : memref<2x128xf32, #tpu.memory_space<vmem>>, vector<1x128xf32>
    %5 = vector.broadcast %3 : vector<1x128xf32> to vector<8x128xf32>
    %6 = arith.cmpf ogt, %2, %5 : vector<8x128xf32>
    %cst = arith.constant 0.000000e+00 : f32
    %7 = vector.broadcast %cst : f32 to vector<8x128xf32>
    %8 = arith.select %6, %2, %7 : vector<8x128xi1>, vector<8x128xf32>
    %c0_6 = arith.constant 0 : index
    %c0_7 = arith.constant 0 : index
    %9 = vector.load %arg4[%c0_6, %c0_7] : memref<8x128xf32, #tpu.memory_space<vmem>>, vector<8x128xf32>
    tpu.vector_store %arg4[%c0_6, %c0_7], %8 {strides = array<i32>} : memref<8x128xf32, #tpu.memory_space<vmem>>, vector<8x128xf32>,
    %10 = vector.broadcast %4 : vector<1x128xf32> to vector<8x128xf32>
    %11 = arith.mulf %2, %10 : vector<8x128xf32>
    %12 = arith.select %6, %7, %11 : vector<8x128xi1>, vector<8x128xf32>
    %c0_8 = arith.constant 0 : index
    %c0_9 = arith.constant 0 : index
    %13 = vector.load %arg5[%c0_8, %c0_9] : memref<8x128xf32, #tpu.memory_space<vmem>>, vector<8x128xf32>
    tpu.vector_store %arg5[%c0_8, %c0_9], %12 {strides = array<i32>} : memref<8x128xf32, #tpu.memory_space<vmem>>, vector<8x128xf32>,
    return
  }
  func.func @transform_0(%arg0: i32) -> (i32, i32) {
    %c0_i32 = arith.constant 0 : i32
    %c0_i32_0 = arith.constant 0 : i32
    return %arg0, %c0_i32 : i32, i32
  }
  func.func @transform_1(%arg0: i32) -> (i32, i32) {
    %c0_i32 = arith.constant 0 : i32
    %c0_i32_0 = arith.constant 0 : i32
    return %arg0, %c0_i32 : i32, i32
  }
  func.func @transform_2(%arg0: i32) -> (i32, i32) {
    %c0_i32 = arith.constant 0 : i32
    %c0_i32_0 = arith.constant 0 : i32
    %c0_i32_1 = arith.constant 0 : i32
    return %c0_i32, %c0_i32_0 : i32, i32
  }
  func.func @transform_3(%arg0: i32) -> (i32, i32) {
    %c0_i32 = arith.constant 0 : i32
    %c0_i32_0 = arith.constant 0 : i32
    return %arg0, %c0_i32 : i32, i32
  }
  func.func @transform_4(%arg0: i32) -> (i32, i32) {
    %c0_i32 = arith.constant 0 : i32
    %c0_i32_0 = arith.constant 0 : i32
    return %arg0, %c0_i32 : i32, i32
  }
}

</mosaic_0001>

<llo_original>
// kernel: tpu_custom_call.1
$region0: #{tpu_custom_call.1}
  #allocation0 [shape = 'u32[]', space=smem, size = 0x4, offset = 0x4, fixed_abs, tag = 'smem constant byte address 0x4 - core index']
  #allocation1 [shape = 'u32[144,128]{1,0:T(1,128)}', space=vmem, size = 0x12000, scoped, tag = 'internal scratch']
  %s0 = inlined_call_operand.hbm [shape: f32[8,128], index: 0, kind: input, shape index: {}]
  %s1 = inlined_call_operand.hbm [shape: f32[8,128], index: 1, kind: input, shape index: {}]
  %s2 = inlined_call_operand.vmem [shape: f32[2,128], index: 2, kind: input, shape index: {}]
  %s3 = inlined_call_operand.hbm [shape: f32[8,128], index: 3, kind: output, shape index: {0}]
  %s4 = inlined_call_operand.hbm [shape: f32[8,128], index: 4, kind: output, shape index: {1}]
  %5 = xla_tuple %s3, %s4
  %s6 = sld [smem:[#allocation0]]
  $region38: #{tpu_custom_call.1} parent=0
    _
  %s8 = ssub.s32 1, %s6
  %s9 = scalar_select 0, %s8, %s6
  $region1: #{tpu_custom_call.1} parent=0
    #allocation2 [shape = 'u8[4096]{0}', space=vmem, size = 0x1000, scoped, tag = 'input window, operand 0, single buffered']
    #allocation3 [shape = 's32[1]{0}', space=sflag, size = 0x4, scoped, tag = 'scoped memory for tpu_custom_call.1']
    #allocation4 [shape = 's32[1]{0}', space=sflag, size = 0x4, scoped, tag = 'scoped memory for tpu_custom_call.1']
    #allocation5 [shape = 'u8[4096]{0}', space=vmem, size = 0x1000, scoped, tag = 'input window, operand 1, single buffered']
    #allocation6 [shape = 's32[1]{0}', space=sflag, size = 0x4, scoped, tag = 'scoped memory for tpu_custom_call.1']
    #allocation7 [shape = 'u8[4096]{0}', space=vmem, size = 0x1000, scoped, tag = 'output window, operand 0, single buffered']
    #allocation8 [shape = 'u8[4096]{0}', space=vmem, size = 0x1000, scoped, tag = 'output window, operand 1, single buffered']
    #allocation9 [shape = 's32[1]{0}', space=sflag, size = 0x4, scoped, tag = 'scoped memory for tpu_custom_call.1']
    %10 = vsyncpa [#allocation3], 0
    %11 = vsyncpa [#allocation6], 0
    %12 = vsyncpa [#allocation4], 0
    %13 = vsyncpa [#allocation9], 0
    // Predicated region
    $region2: #{tpu_custom_call.1} parent=1 // pred_check
      _
    $region3: #{tpu_custom_call.1} parent=1 // pred_check_branch
      %15 = sbr.rel (0) target = $region5
    $region4: #{tpu_custom_call.1} parent=1 // pred_region
      %s17 = ssub.s32 128, 128
      %18 = vsyncadd [#allocation3], %s17
      %s20 = sshll.u32 [#allocation2], 4
      %s21 = int_to_ptr.vmem [resolvable:$true] %s20
      %23 = dma.hbm_to_vmem [thread:$0]  %s0, 128, %s21, [#allocation3]
    $region5: #{tpu_custom_call.1} parent=1 // pred_fallthru
      _
    // Predicated region
    $region6: #{tpu_custom_call.1} parent=1 // pred_check
      _
    $region7: #{tpu_custom_call.1} parent=1 // pred_check_branch
      %25 = sbr.rel (0) target = $region9
    $region8: #{tpu_custom_call.1} parent=1 // pred_region
      %s27 = ssub.s32 128, 128
      %28 = vsyncadd [#allocation6], %s27
      %s30 = sshll.u32 [#allocation5], 4
      %s31 = int_to_ptr.vmem [resolvable:$true] %s30
      %33 = dma.hbm_to_vmem [thread:$0]  %s1, 128, %s31, [#allocation6]
    $region9: #{tpu_custom_call.1} parent=1 // pred_fallthru
      _
    // Predicated region
    $region10: #{tpu_custom_call.1} parent=1 // pred_check
      _
    $region11: #{tpu_custom_call.1} parent=1 // pred_check_branch
      %35 = sbr.rel (0) target = $region13
    $region12: #{tpu_custom_call.1} parent=1 // pred_region
      _
    $region13: #{tpu_custom_call.1} parent=1 // pred_fallthru
      _
    // Predicated region
    $region14: #{tpu_custom_call.1} parent=1 // pred_check
      _
    $region15: #{tpu_custom_call.1} parent=1 // pred_check_branch
      %37 = sbr.rel (0) target = $region17
    $region16: #{tpu_custom_call.1} parent=1 // pred_region
      %38 = dma.done [#allocation3], 128
    $region17: #{tpu_custom_call.1} parent=1 // pred_fallthru
      _
    // Predicated region
    $region18: #{tpu_custom_call.1} parent=1 // pred_check
      _
    $region19: #{tpu_custom_call.1} parent=1 // pred_check_branch
      %40 = sbr.rel (0) target = $region21
    $region20: #{tpu_custom_call.1} parent=1 // pred_region
      %41 = dma.done [#allocation6], 128
    $region21: #{tpu_custom_call.1} parent=1 // pred_fallthru
      _
    %v42 = vld [vmem:[#allocation5] sm:$0xff]
    %v43 = vld [vmem:[#allocation2] sm:$0xff]
    %v44 = vadd.f32 %v42, %v43
    %v45 = vld [vmem:[%s2] sm:$0x1]
    %v46 = vld [vmem:[%s2 + $0x1] sm:$0x1]
    %v47 = vlaneseq
    %v48 = vshrl.u32 %v47, 7
    %v49 = vsub.s32 0, %v48
    %v50 = vrot.slane %v45, %v49
    %vm51 = vcmp.gt.f32.partialorder %v44, %v50
    %v52 = vsel %vm51, %v44, 0.0
    %53 = vst [vmem:[#allocation7] sm:$0xff] %v52
    %v54 = vlaneseq
    %v55 = vshrl.u32 %v54, 7
    %v56 = vsub.s32 0, %v55
    %v57 = vrot.slane %v46, %v56
    %v58 = vmul.f32 %v44, %v57
    %v59 = vsel %vm51, 0.0, %v58
    %60 = vst [vmem:[#allocation8] sm:$0xff] %v59
    // Predicated region
    $region22: #{tpu_custom_call.1} parent=1 // pred_check
      _
    $region23: #{tpu_custom_call.1} parent=1 // pred_check_branch
      %62 = sbr.rel (0) target = $region25
    $region24: #{tpu_custom_call.1} parent=1 // pred_region
      %s64 = ssub.s32 128, 128
      %65 = vsyncadd [#allocation4], %s64
      %s67 = sshll.u32 [#allocation7], 4
      %s68 = int_to_ptr.vmem [resolvable:$true] %s67
      %70 = dma.vmem_to_hbm [thread:$0]  %s68, 128, %s3, [#allocation4]
    $region25: #{tpu_custom_call.1} parent=1 // pred_fallthru
      _
    // Predicated region
    $region26: #{tpu_custom_call.1} parent=1 // pred_check
      _
    $region27: #{tpu_custom_call.1} parent=1 // pred_check_branch
      %72 = sbr.rel (0) target = $region29
    $region28: #{tpu_custom_call.1} parent=1 // pred_region
      %s74 = ssub.s32 128, 128
      %75 = vsyncadd [#allocation9], %s74
      %s77 = sshll.u32 [#allocation8], 4
      %s78 = int_to_ptr.vmem [resolvable:$true] %s77
      %80 = dma.vmem_to_hbm [thread:$0]  %s78, 128, %s4, [#allocation9]
    $region29: #{tpu_custom_call.1} parent=1 // pred_fallthru
      _
    // Predicated region
    $region30: #{tpu_custom_call.1} parent=1 // pred_check
      _
    $region31: #{tpu_custom_call.1} parent=1 // pred_check_branch
      %82 = sbr.rel (0) target = $region33
    $region32: #{tpu_custom_call.1} parent=1 // pred_region
      %83 = dma.done [#allocation4], 128
    $region33: #{tpu_custom_call.1} parent=1 // pred_fallthru
      _
    // Predicated region
    $region34: #{tpu_custom_call.1} parent=1 // pred_check
      _
    $region35: #{tpu_custom_call.1} parent=1 // pred_check_branch
      %85 = sbr.rel (0) target = $region37
    $region36: #{tpu_custom_call.1} parent=1 // pred_region
      %86 = dma.done [#allocation9], 128
    $region37: #{tpu_custom_call.1} parent=1 // pred_fallthru
      _
    %87 = vsyncpa [#allocation3], 1
    %88 = vsyncpa [#allocation6], 1
    %89 = vsyncpa [#allocation4], 1
    %90 = vsyncpa [#allocation9], 1

</llo_original>
